<compile_context>
chip_gen: v7x
topology: tpu7x:2x2x1
jax: 0.10.0
libtpu: 0.0.40
codegen_flags: <defaults>
</compile_context>

<pallas_src>
import functools
import math

import jax
import jax.numpy as jnp
from jax.experimental import pallas as pl
from jax.experimental.pallas import tpu as pltpu

MASK_FILL = -1e9  # matches torch masked_fill(mask == 0, -1000000000.0)


def _round_up(x: int, m: int) -> int:
    return (x + m - 1) // m * m


# ---------------------------------------------------------------------------
# Kernel A: key projection  kp = bf16(key @ Wk^T + bk)
# ---------------------------------------------------------------------------
def _k_proj_kernel(xk_ref, wkt_ref, bk_ref, kp_ref):
    xk = xk_ref[...].astype(jnp.bfloat16)
    kp = jnp.dot(xk, wkt_ref[...], preferred_element_type=jnp.float32)
    kp = kp + bk_ref[...].astype(jnp.float32)
    kp_ref[...] = kp.astype(kp_ref.dtype)


# ---------------------------------------------------------------------------
# Kernel B (per query-row tile):
#   q-projection + content logits + relation logits + mask + row softmax
# ---------------------------------------------------------------------------
def _pointer_attn_kernel(xq_ref, wqt_ref, bq_ref, kp_ref, ek_ref,
                         rel_ref, mask_ref, out_ref, *,
                         num_relation_kinds: int, scale: float):
    # Project this tile of queries: (TQ, H), bf16 operands, f32 accumulation.
    q = jnp.dot(xq_ref[...].astype(jnp.bfloat16), wqt_ref[...],
                preferred_element_type=jnp.float32)
    q = q + bq_ref[...].astype(jnp.float32)
    q_bf = q.astype(jnp.bfloat16)

    # Content logits: q @ k^T -> (TQ, S_k_pad)  (NT matmul on the MXU).
    qk = jax.lax.dot_general(q_bf, kp_ref[...], (((1,), (1,)), ((), ())),
                             preferred_element_type=jnp.float32)

    # Relation logits: P = q @ E_k^T -> (TQ, R); rel_score[i,j] = P[i, rel[i,j]]
    p = jax.lax.dot_general(q_bf, ek_ref[...], (((1,), (1,)), ((), ())),
                            preferred_element_type=jnp.float32)
    rel = rel_ref[...]
    r_iota = jax.lax.broadcasted_iota(jnp.int32, (1, num_relation_kinds), 1)
    rel_score = jnp.zeros_like(qk)
    for r in range(num_relation_kinds):  # static unrolled loop, R is small
        p_col = jnp.sum(jnp.where(r_iota == r, p, 0.0), axis=1, keepdims=True)
        rel_score = rel_score + (rel == r).astype(jnp.float32) * p_col

    scores = (qk + rel_score) * scale
    scores = jnp.where(mask_ref[...] == 0, MASK_FILL, scores)

    # Row softmax (masked / padded key columns underflow to exactly 0).
    m = jnp.max(scores, axis=-1, keepdims=True)
    e = jnp.exp(scores - m)
    denom = jnp.sum(e, axis=-1, keepdims=True)
    out_ref[...] = (e * pl.reciprocal(denom, approx=False)).astype(out_ref.dtype)


# ---------------------------------------------------------------------------
# Wrapper
# ---------------------------------------------------------------------------
def pointer_with_relations(query, key, value, relation,
                           wq, bq, wk, bk, wv, bv,
                           rel_k_emb, rel_v_emb, mask=None, *, tile_q=128):
    """Forward pass of PointerWithRelations.

    Returns attn[0, 0]: the (S_q, S_k) softmax attention of batch 0 / head 0.
    The value-side branch (value, Wv/bv, relation_v embedding, dropout) feeds a
    result the PyTorch module discards, so it is not computed here.
    """
    del value, wv, bv, rel_v_emb  # dead w.r.t. the module's returned tensor

    h = query.shape[-1]
    xq = query[0].astype(jnp.float32)   # (S_q, H): output depends only on batch 0
    xk = key[0].astype(jnp.float32)     # (S_k, H)
    s_q, s_k = xq.shape[0], xk.shape[0]
    num_rel = rel_k_emb.shape[0]

    # bf16 parameter storage (MXU-native operands; accumulation stays f32).
    wqt = wq.T.astype(jnp.bfloat16)
    wkt = wk.T.astype(jnp.bfloat16)
    ek = rel_k_emb.astype(jnp.bfloat16)
    bq2 = bq.reshape(1, h).astype(jnp.float32)
    bk2 = bk.reshape(1, h).astype(jnp.float32)

    # Padding: key axis lane-dense (multiple of 128, suppressed via the mask);
    # query axis to a sublane-aligned tile so the grid pipelines / megacores.
    s_k_pad = _round_up(s_k, 128)
    tq = min(tile_q, _round_up(s_q, 8))
    s_q_pad = _round_up(s_q, tq)

    xq_p = jnp.zeros((s_q_pad, h), jnp.float32).at[:s_q].set(xq)
    xk_p = jnp.zeros((s_k_pad, h), jnp.float32).at[:s_k].set(xk)
    rel_p = jnp.zeros((s_q_pad, s_k_pad), jnp.int32).at[:s_q, :s_k].set(
        relation.astype(jnp.int32))
    mask_real = (jnp.ones((s_q, s_k), jnp.int32) if mask is None
                 else (mask != 0).astype(jnp.int32))
    mask_p = jnp.zeros((s_q_pad, s_k_pad), jnp.int32).at[:s_q, :s_k].set(mask_real)

    # --- Kernel A: project keys once (no recompute across query tiles). -----
    tk = min(128, s_k_pad)
    kp = pl.pallas_call(
        _k_proj_kernel,
        out_shape=jax.ShapeDtypeStruct((s_k_pad, h), jnp.bfloat16),
        grid_spec=pltpu.PrefetchScalarGridSpec(
            num_scalar_prefetch=0,
            grid=(s_k_pad // tk,),
            in_specs=[
                pl.BlockSpec((tk, h), lambda i: (i, 0)),   # key rows
                pl.BlockSpec((h, h), lambda i: (0, 0)),    # Wk^T (resident)
                pl.BlockSpec((1, h), lambda i: (0, 0)),    # bk
            ],
            out_specs=pl.BlockSpec((tk, h), lambda i: (i, 0)),
        ),
        compiler_params=pltpu.CompilerParams(
            dimension_semantics=("parallel",),
            vmem_limit_bytes=64 * 1024 * 1024),
        cost_estimate=pl.CostEstimate(
            flops=2 * s_k_pad * h * h,
            transcendentals=0,
            bytes_accessed=s_k_pad * h * 4 + h * h * 2 + h * 4 + s_k_pad * h * 2),
    )(xk_p, wkt, bk2)

    # --- Kernel B: fused q-projection + relation-aware logits + softmax. ----
    kernel = functools.partial(_pointer_attn_kernel,
                               num_relation_kinds=num_rel,
                               scale=1.0 / math.sqrt(h))
    flops = (2 * s_q_pad * h * h                   # q projection
             + 2 * s_q_pad * s_k_pad * h           # q @ k^T
             + 2 * s_q_pad * num_rel * h           # q @ E_k^T
             + 4 * s_q_pad * s_k_pad * num_rel)    # one-hot select / accumulate
    bytes_accessed = (s_q_pad * h * 4 + h * h * 2 + h * 4
                      + s_k_pad * h * 2 + num_rel * h * 2
                      + 2 * s_q_pad * s_k_pad * 4   # relation ids + mask
                      + s_q_pad * s_k_pad * 4)      # output
    attn = pl.pallas_call(
        kernel,
        out_shape=jax.ShapeDtypeStruct((s_q_pad, s_k_pad), jnp.float32),
        grid_spec=pltpu.PrefetchScalarGridSpec(
            num_scalar_prefetch=0,
            grid=(s_q_pad // tq,),
            in_specs=[
                pl.BlockSpec((tq, h), lambda i: (i, 0)),          # query rows
                pl.BlockSpec((h, h), lambda i: (0, 0)),           # Wq^T (resident)
                pl.BlockSpec((1, h), lambda i: (0, 0)),           # bq
                pl.BlockSpec((s_k_pad, h), lambda i: (0, 0)),     # projected keys (resident)
                pl.BlockSpec((num_rel, h), lambda i: (0, 0)),     # relation_k embedding table
                pl.BlockSpec((tq, s_k_pad), lambda i: (i, 0)),    # relation ids
                pl.BlockSpec((tq, s_k_pad), lambda i: (i, 0)),    # mask
            ],
            out_specs=pl.BlockSpec((tq, s_k_pad), lambda i: (i, 0)),
        ),
        compiler_params=pltpu.CompilerParams(
            dimension_semantics=("parallel",),
            vmem_limit_bytes=64 * 1024 * 1024),
        cost_estimate=pl.CostEstimate(
            flops=flops,
            transcendentals=s_q_pad * s_k_pad,   # exp
            bytes_accessed=bytes_accessed),
    )(xq_p, wqt, bq2, kp, ek, rel_p, mask_p)

    return attn[:s_q, :s_k]


# ---------------------------------------------------------------------------
# Pure-JAX reference (mirrors the kernel's bf16 matmul precision)
# ---------------------------------------------------------------------------
def _reference(query, key, relation, wq, bq, wk, bk, rel_k_emb, mask=None):
    h = query.shape[-1]
    bf = jnp.bfloat16
    qp = (jnp.dot(query[0].astype(bf), wq.T.astype(bf),
                  preferred_element_type=jnp.float32)
          + bq.reshape(1, h)).astype(bf)
    kp = (jnp.dot(key[0].astype(bf), wk.T.astype(bf),
                  preferred_element_type=jnp.float32)
          + bk.reshape(1, h)).astype(bf)
    qk = jnp.dot(qp, kp.T, preferred_element_type=jnp.float32)
    p = jnp.dot(qp, rel_k_emb.astype(bf).T, preferred_element_type=jnp.float32)
    rel_score = jnp.take_along_axis(p, relation.astype(jnp.int32), axis=1)
    scores = (qk + rel_score) / math.sqrt(h)
    if mask is not None:
        scores = jnp.where(mask == 0, MASK_FILL, scores)
    return jax.nn.softmax(scores, axis=-1)


if __name__ == "__main__":
    root = jax.random.PRNGKey(0)
    ks = jax.random.split(root, 12)
    B, S, H, R = 2, 8, 32, 10  # batch, seq, hidden_size, num_relation_kinds

    query = jax.random.normal(ks[0], (B, S, H), jnp.float32)
    key_in = jax.random.normal(ks[1], (B, S, H), jnp.float32)
    value = jax.random.normal(ks[2], (B, S, H), jnp.float32)
    relation = jax.random.randint(ks[3], (S, S), 0, R, dtype=jnp.int32)

    scale_w = 1.0 / math.sqrt(H)
    wq = jax.random.normal(ks[4], (H, H), jnp.float32) * scale_w
    wk = jax.random.normal(ks[5], (H, H), jnp.float32) * scale_w
    wv = jax.random.normal(ks[6], (H, H), jnp.float32) * scale_w
    bq = jax.random.normal(ks[7], (H,), jnp.float32) * 0.01
    bk = jax.random.normal(ks[8], (H,), jnp.float32) * 0.01
    bv = jax.random.normal(ks[9], (H,), jnp.float32) * 0.01
    rel_k_emb = jax.random.normal(ks[10], (R, H), jnp.float32) * 0.1
    rel_v_emb = jax.random.normal(ks[11], (R, H), jnp.float32) * 0.1

    # TODO(synk): training-mode dropout is applied by the module only on the
    # discarded value path, so it never affects the returned tensor.
    out = pointer_with_relations(query, key_in, value, relation,
                                 wq, bq, wk, bk, wv, bv,
                                 rel_k_emb, rel_v_emb, mask=None)
    out = jax.block_until_ready(out)

    ref = _reference(query, key_in, relation, wq, bq, wk, bk, rel_k_emb, mask=None)
    assert out.shape == (S, S), out.shape
    assert jnp.allclose(jnp.sum(out, axis=-1), 1.0, atol=1e-3), "rows must sum to 1"
    assert jnp.allclose(out, ref, atol=2e-3, rtol=2e-3), (
        f"mismatch vs reference, max abs err = {jnp.max(jnp.abs(out - ref))}")

    print("KERNEL_OK")
</pallas_src>

<mosaic_0001>
module attributes {stable_mosaic.version = 11 : i64} {
  func.func @_k_proj_kernel(%arg0: i32, %arg1: memref<128x32xf32, #tpu.memory_space<vmem>>, %arg2: memref<32x32xbf16, #tpu.memory_space<vmem>>, %arg3: memref<1x32xf32, #tpu.memory_space<vmem>>, %arg4: memref<128x32xbf16, #tpu.memory_space<vmem>>) attributes {dimension_semantics = [#tpu.dimension_semantics<parallel>], iteration_bounds = array<i64: 1>, scalar_prefetch = 0 : i64, scratch_operands = 0 : i64, tpu.core_type = #tpu.core_type<tc>, window_params = [{transform_indices = @transform_0, window_bounds = array<i64: 128, 32>}, {pipeline_mode = #tpu.pipeline_mode<synchronous>, transform_indices = @transform_1, window_bounds = array<i64: 32, 32>}, {pipeline_mode = #tpu.pipeline_mode<synchronous>, transform_indices = @transform_2, window_bounds = array<i64: 1, 32>}, {transform_indices = @transform_3, window_bounds = array<i64: 128, 32>}]} {
    %c0 = arith.constant 0 : index
    %c0_0 = arith.constant 0 : index
    %0 = vector.load %arg1[%c0, %c0_0] : memref<128x32xf32, #tpu.memory_space<vmem>>, vector<128x32xf32>
    %1 = arith.truncf %0 : vector<128x32xf32> to vector<128x32xbf16>
    %c0_1 = arith.constant 0 : index
    %c0_2 = arith.constant 0 : index
    %2 = vector.load %arg2[%c0_1, %c0_2] : memref<32x32xbf16, #tpu.memory_space<vmem>>, vector<32x32xbf16>
    %cst = arith.constant dense<0.000000e+00> : vector<128x32xf32>
    %3 = tpu.matmul %1, %2, %cst {dimension_numbers = #tpu.dot_dimension_numbers<[1], [0], [0], [1], [0, 0, 1, 1], [], []>} : vector<128x32xbf16>, vector<32x32xbf16>, vector<128x32xf32> -> vector<128x32xf32>
    %c0_3 = arith.constant 0 : index
    %c0_4 = arith.constant 0 : index
    %4 = vector.load %arg3[%c0_3, %c0_4] : memref<1x32xf32, #tpu.memory_space<vmem>>, vector<1x32xf32>
    %5 = vector.broadcast %4 : vector<1x32xf32> to vector<128x32xf32>
    %6 = arith.addf %3, %5 : vector<128x32xf32>
    %7 = arith.truncf %6 : vector<128x32xf32> to vector<128x32xbf16>
    %c0_5 = arith.constant 0 : index
    %c0_6 = arith.constant 0 : index
    %8 = vector.load %arg4[%c0_5, %c0_6] : memref<128x32xbf16, #tpu.memory_space<vmem>>, vector<128x32xbf16>
    tpu.vector_store %arg4[%c0_5, %c0_6], %7 {strides = array<i32>} : memref<128x32xbf16, #tpu.memory_space<vmem>>, vector<128x32xbf16>,
    return
  }
  func.func @transform_0(%arg0: i32) -> (i32, i32) {
    %c0_i32 = arith.constant 0 : i32
    %c0_i32_0 = arith.constant 0 : i32
    return %arg0, %c0_i32 : i32, i32
  }
  func.func @transform_1(%arg0: i32) -> (i32, i32) {
    %c0_i32 = arith.constant 0 : i32
    %c0_i32_0 = arith.constant 0 : i32
    %c0_i32_1 = arith.constant 0 : i32
    return %c0_i32, %c0_i32_0 : i32, i32
  }
  func.func @transform_2(%arg0: i32) -> (i32, i32) {
    %c0_i32 = arith.constant 0 : i32
    %c0_i32_0 = arith.constant 0 : i32
    %c0_i32_1 = arith.constant 0 : i32
    return %c0_i32, %c0_i32_0 : i32, i32
  }
  func.func @transform_3(%arg0: i32) -> (i32, i32) {
    %c0_i32 = arith.constant 0 : i32
    %c0_i32_0 = arith.constant 0 : i32
    return %arg0, %c0_i32 : i32, i32
  }
}

</mosaic_0001>

<llo_original>
// kernel: tpu_custom_call.1
$region0: #{tpu_custom_call.1}
  #allocation0 [shape = 'u32[]', space=smem, size = 0x4, offset = 0x4, fixed_abs, tag = 'smem constant byte address 0x4 - core index']
  #allocation1 [shape = 'u32[144,128]{1,0:T(1,128)}', space=vmem, size = 0x12000, scoped, tag = 'internal scratch']
  %s0 = inlined_call_operand.hbm [shape: f32[128,32], index: 0, kind: input, shape index: {}]
  %s1 = inlined_call_operand.hbm [shape: bf16[32,32], index: 1, kind: input, shape index: {}]
  %s2 = inlined_call_operand.hbm [shape: f32[1,32], index: 2, kind: input, shape index: {}]
  %s3 = inlined_call_operand.hbm [shape: bf16[128,32], index: 3, kind: output, shape index: {}]
  %s4 = sld [smem:[#allocation0]]
  $region34: #{tpu_custom_call.1} parent=0
    _
  %s6 = ssub.s32 1, %s4
  %s7 = scalar_select 0, %s6, %s4
  $region1: #{tpu_custom_call.1} parent=0
    #allocation2 [shape = 'u8[65536]{0}', space=vmem, size = 0x10000, scoped, tag = 'input window, operand 0, single buffered']
    #allocation3 [shape = 's32[1]{0}', space=sflag, size = 0x4, scoped, tag = 'scoped memory for tpu_custom_call.1']
    #allocation4 [shape = 's32[1]{0}', space=sflag, size = 0x4, scoped, tag = 'scoped memory for tpu_custom_call.1']
    #allocation5 [shape = 'u8[8192]{0}', space=vmem, size = 0x2000, scoped, tag = 'input window, operand 1, single buffered']
    #allocation6 [shape = 's32[1]{0}', space=sflag, size = 0x4, scoped, tag = 'scoped memory for tpu_custom_call.1']
    #allocation7 [shape = 'u8[512]{0}', space=vmem, size = 0x400, scoped, tag = 'input window, operand 2, single buffered']
    #allocation8 [shape = 'u8[32768]{0}', space=vmem, size = 0x8000, scoped, tag = 'output window, operand 0, single buffered']
    %8 = vsyncpa [#allocation3], 0
    %9 = vsyncpa [#allocation6], 0
    %10 = vsyncpa [#allocation4], 0
    // Predicated region
    $region2: #{tpu_custom_call.1} parent=1 // pred_check
      _
    $region3: #{tpu_custom_call.1} parent=1 // pred_check_branch
      %12 = sbr.rel (0) target = $region5
    $region4: #{tpu_custom_call.1} parent=1 // pred_region
      %s14 = ssub.s32 2048, 2048
      %15 = vsyncadd [#allocation3], %s14
      %s16 = sshll.u32 [#allocation2], 4
      %s17 = int_to_ptr.vmem [resolvable:$true] %s16
      %22 = dma.hbm_to_vmem [thread:$0]  %s0, 2048, %s17, [#allocation3], 128, 128, 8
    $region5: #{tpu_custom_call.1} parent=1 // pred_fallthru
      _
    // Predicated region
    $region6: #{tpu_custom_call.1} parent=1 // pred_check
      _
    $region7: #{tpu_custom_call.1} parent=1 // pred_check_branch
      %24 = sbr.rel (0) target = $region9
    $region8: #{tpu_custom_call.1} parent=1 // pred_region
      %s26 = ssub.s32 256, 256
      %27 = vsyncadd [#allocation6], %s26
      %s28 = sshll.u32 [#allocation5], 4
      %s29 = int_to_ptr.vmem [resolvable:$true] %s28
      %34 = dma.hbm_to_vmem [thread:$0]  %s1, 256, %s29, [#allocation6], 64, 64, 4
    $region9: #{tpu_custom_call.1} parent=1 // pred_fallthru
      _
    // Predicated region
    $region10: #{tpu_custom_call.1} parent=1 // pred_check
      _
    $region11: #{tpu_custom_call.1} parent=1 // pred_check_branch
      %36 = sbr.rel (0) target = $region13
    $region12: #{tpu_custom_call.1} parent=1 // pred_region
      %s38 = ssub.s32 16, 16
      %39 = vsyncadd [#allocation6], %s38
      %s41 = sshll.u32 [#allocation7], 4
      %s42 = int_to_ptr.vmem [resolvable:$true] %s41
      %44 = dma.hbm_to_vmem [thread:$0]  %s2, 16, %s42, [#allocation6]
    $region13: #{tpu_custom_call.1} parent=1 // pred_fallthru
      _
    // Predicated region
    $region14: #{tpu_custom_call.1} parent=1 // pred_check
      _
    $region15: #{tpu_custom_call.1} parent=1 // pred_check_branch
      %46 = sbr.rel (0) target = $region17
    $region16: #{tpu_custom_call.1} parent=1 // pred_region
      %47 = dma.done [#allocation3], 2048
    $region17: #{tpu_custom_call.1} parent=1 // pred_fallthru
      _
    // Predicated region
    $region18: #{tpu_custom_call.1} parent=1 // pred_check
      _
    $region19: #{tpu_custom_call.1} parent=1 // pred_check_branch
      %49 = sbr.rel (0) target = $region21
    $region20: #{tpu_custom_call.1} parent=1 // pred_region
      %50 = dma.done [#allocation6], 256
    $region21: #{tpu_custom_call.1} parent=1 // pred_fallthru
      _
    // Predicated region
    $region22: #{tpu_custom_call.1} parent=1 // pred_check
      _
    $region23: #{tpu_custom_call.1} parent=1 // pred_check_branch
      %52 = sbr.rel (0) target = $region25
    $region24: #{tpu_custom_call.1} parent=1 // pred_region
      %53 = dma.done [#allocation6], 16
    $region25: #{tpu_custom_call.1} parent=1 // pred_fallthru
      _
    %v55 = vld [vmem:[#allocation2] sm:$0xff]
    %v56 = vld [vmem:[#allocation2 + $0x8] sm:$0xff]
    %v57 = vld [vmem:[#allocation2 + $0x10] sm:$0xff]
    %v58 = vld [vmem:[#allocation2 + $0x18] sm:$0xff]
    %v59 = vld [vmem:[#allocation2 + $0x20] sm:$0xff]
    %v60 = vld [vmem:[#allocation2 + $0x28] sm:$0xff]
    %v61 = vld [vmem:[#allocation2 + $0x30] sm:$0xff]
    %v62 = vld [vmem:[#allocation2 + $0x38] sm:$0xff]
    %v63 = vld [vmem:[#allocation2 + $0x40] sm:$0xff]
    %v64 = vld [vmem:[#allocation2 + $0x48] sm:$0xff]
    %v65 = vld [vmem:[#allocation2 + $0x50] sm:$0xff]
    %v66 = vld [vmem:[#allocation2 + $0x58] sm:$0xff]
    %v67 = vld [vmem:[#allocation2 + $0x60] sm:$0xff]
    %v68 = vld [vmem:[#allocation2 + $0x68] sm:$0xff]
    %v69 = vld [vmem:[#allocation2 + $0x70] sm:$0xff]
    %v70 = vld [vmem:[#allocation2 + $0x78] sm:$0xff]
    %v71 = vpack.c.bf16 %v56, %v55
    %v72 = vpack.c.bf16 %v58, %v57
    %v73 = vpack.c.bf16 %v60, %v59
    %v74 = vpack.c.bf16 %v62, %v61
    %v75 = vpack.c.bf16 %v64, %v63
    %v76 = vpack.c.bf16 %v66, %v65
    %v77 = vpack.c.bf16 %v68, %v67
    %v78 = vpack.c.bf16 %v70, %v69
    %v79 = vld [vmem:[#allocation5] sm:$0xf]
    %v80 = vld [vmem:[#allocation5 + $0x4] sm:$0xf]
    %v81 = vld [vmem:[#allocation5 + $0x8] sm:$0xf]
    %v82 = vld [vmem:[#allocation5 + $0xc] sm:$0xf]
    %v83 = vld [vmem:[#allocation7] sm:$0x1]
    %v85 = vlaneseq
    %v86 = vshrl.u32 %v85, 7
    %v87 = vsub.s32 0, %v86
    %v88 = vrot.slane %v83, %v87
    %v94 = vunpack.c.l.b16 %v79
    %v95 = vunpack.c.l.b16 %v80
    %v96 = vunpack.c.l.b16 %v81
    %v97 = vunpack.c.l.b16 %v82
    %v98 = vpack.c.b16 %v95, %v94
    %v99 = vpack.c.b16 %v97, %v96
    %vm102 = vcmask 261120
    %v104 = vsel %vm102, %v71, 0
    %v107 = vsel %vm102, %v72, 0
    %v110 = vsel %vm102, %v73, 0
    %v113 = vsel %vm102, %v74, 0
    %v116 = vsel %vm102, %v75, 0
    %v119 = vsel %vm102, %v76, 0
    %v122 = vsel %vm102, %v77, 0
    %v125 = vsel %vm102, %v78, 0
    %127 = vmatprep.subr.bf16.mxu0 0
    %128 = vmatpush1.bf16.msra.mxu0 %v98
    %129 = vmatprep.subr.bf16.mxu0 0
    %130 = vmatpush1.bf16.msra.mxu0 %v99
    %131 = vmatprep.subr.bf16.mxu0 0
    %132 = vmatpush1.bf16.msra.mxu0 0
    %133 = vmatprep.subr.bf16.mxu0 0
    %134 = vmatpush1.bf16.msra.mxu0 0
    %135 = vmatprep.subr.bf16.mxu0 0
    %136 = vmatpush1.bf16.msra.mxu0 0
    %137 = vmatprep.subr.bf16.mxu0 0
    %138 = vmatpush1.bf16.msra.mxu0 0
    %139 = vmatprep.subr.bf16.mxu0 0
    %140 = vmatpush1.bf16.msra.mxu0 0
    %141 = vmatprep.subr.bf16.mxu0 0
    %142 = vmatpush1.bf16.msra.mxu0 0
    %143 = vmatprep.subr.bf16.mxu0 0
    %144 = vmatpush1.bf16.msra.mxu0 0
    %145 = vmatprep.subr.bf16.mxu0 0
    %146 = vmatpush1.bf16.msra.mxu0 0
    %147 = vmatprep.subr.bf16.mxu0 0
    %148 = vmatpush1.bf16.msra.mxu0 0
    %149 = vmatprep.subr.bf16.mxu0 0
    %150 = vmatpush1.bf16.msra.mxu0 0
    %151 = vmatprep.subr.bf16.mxu0 0
    %152 = vmatpush1.bf16.msra.mxu0 0
    %153 = vmatprep.subr.bf16.mxu0 0
    %154 = vmatpush1.bf16.msra.mxu0 0
    %155 = vmatprep.subr.bf16.mxu0 0
    %156 = vmatpush1.bf16.msra.mxu0 0
    %157 = vmatprep.subr.bf16.mxu0 0
    %158 = vmatpush1.bf16.msra.mxu0 0
    %159 = vmatprep.mubr.bf16.mxu0 0
    %160 = vmatmul.mubr.bf16.gmra.mrb[0].mxu0 %v104
    %v161 = vpop.f32.mrb[0].mxu0
    %v162 = vadd.f32 %v88, %v161
    %v163 = vpop.f32.mrb[0].mxu0
    %v164 = vpop.f32.mrb[0].mxu0
    %v165 = vadd.f32 %v88, %v164
    %v166 = vpop.f32.mrb[0].mxu0
    %167 = vmatprep.mubr.bf16.mxu0 0
    %168 = vmatmul.mubr.bf16.gmra.mrb[0].mxu0 %v107
    %v169 = vpop.f32.mrb[0].mxu0
    %v170 = vadd.f32 %v88, %v169
    %v171 = vpop.f32.mrb[0].mxu0
    %v172 = vpop.f32.mrb[0].mxu0
    %v173 = vadd.f32 %v88, %v172
    %v174 = vpop.f32.mrb[0].mxu0
    %175 = vmatprep.mubr.bf16.mxu0 0
    %176 = vmatmul.mubr.bf16.gmra.mrb[0].mxu0 %v110
    %v177 = vpop.f32.mrb[0].mxu0
    %v178 = vadd.f32 %v88, %v177
    %v179 = vpop.f32.mrb[0].mxu0
    %v180 = vpop.f32.mrb[0].mxu0
    %v181 = vadd.f32 %v88, %v180
    %v182 = vpop.f32.mrb[0].mxu0
    %183 = vmatprep.mubr.bf16.mxu0 0
    %184 = vmatmul.mubr.bf16.gmra.mrb[0].mxu0 %v113
    %v185 = vpop.f32.mrb[0].mxu0
    %v186 = vadd.f32 %v88, %v185
    %v187 = vpop.f32.mrb[0].mxu0
    %v188 = vpop.f32.mrb[0].mxu0
    %v189 = vadd.f32 %v88, %v188
    %v190 = vpop.f32.mrb[0].mxu0
    %191 = vmatprep.mubr.bf16.mxu0 0
    %192 = vmatmul.mubr.bf16.gmra.mrb[0].mxu0 %v116
    %v193 = vpop.f32.mrb[0].mxu0
    %v194 = vadd.f32 %v88, %v193
    %v195 = vpop.f32.mrb[0].mxu0
    %v196 = vpop.f32.mrb[0].mxu0
    %v197 = vadd.f32 %v88, %v196
    %v198 = vpop.f32.mrb[0].mxu0
    %199 = vmatprep.mubr.bf16.mxu0 0
    %200 = vmatmul.mubr.bf16.gmra.mrb[0].mxu0 %v119
    %v201 = vpop.f32.mrb[0].mxu0
    %v202 = vadd.f32 %v88, %v201
    %v203 = vpop.f32.mrb[0].mxu0
    %v204 = vpop.f32.mrb[0].mxu0
    %v205 = vadd.f32 %v88, %v204
    %v206 = vpop.f32.mrb[0].mxu0
    %207 = vmatprep.mubr.bf16.mxu0 0
    %208 = vmatmul.mubr.bf16.gmra.mrb[0].mxu0 %v122
    %v209 = vpop.f32.mrb[0].mxu0
    %v210 = vadd.f32 %v88, %v209
    %v211 = vpop.f32.mrb[0].mxu0
    %v212 = vpop.f32.mrb[0].mxu0
    %v213 = vadd.f32 %v88, %v212
    %v214 = vpop.f32.mrb[0].mxu0
    %215 = vmatprep.mubr.bf16.mxu0 0
    %216 = vmatmul.mubr.bf16.gmra.mrb[0].mxu0 %v125
    %v217 = vpop.f32.mrb[0].mxu0
    %v218 = vadd.f32 %v88, %v217
    %v219 = vpop.f32.mrb[0].mxu0
    %v220 = vpop.f32.mrb[0].mxu0
    %v221 = vadd.f32 %v88, %v220
    %v222 = vpop.f32.mrb[0].mxu0
    %223 = vdwg.mxu0
    %v224 = vpack.c.bf16 %v165, %v162
    %v225 = vpack.c.bf16 %v173, %v170
    %v226 = vpack.c.bf16 %v181, %v178
    %v227 = vpack.c.bf16 %v189, %v186
    %v228 = vpack.c.bf16 %v197, %v194
    %v229 = vpack.c.bf16 %v205, %v202
    %v230 = vpack.c.bf16 %v213, %v210
    %v231 = vpack.c.bf16 %v221, %v218
    %v240 = vunpack.c.l.b16 %v224
    %v241 = vunpack.c.h.b16 %v224
    %v242 = vunpack.c.l.b16 %v225
    %v243 = vunpack.c.h.b16 %v225
    %v244 = vunpack.c.l.b16 %v226
    %v245 = vunpack.c.h.b16 %v226
    %v246 = vunpack.c.l.b16 %v227
    %v247 = vunpack.c.h.b16 %v227
    %v248 = vunpack.c.l.b16 %v228
    %v249 = vunpack.c.h.b16 %v228
    %v250 = vunpack.c.l.b16 %v229
    %v251 = vunpack.c.h.b16 %v229
    %v252 = vunpack.c.l.b16 %v230
    %v253 = vunpack.c.h.b16 %v230
    %v254 = vunpack.c.l.b16 %v231
    %v255 = vunpack.c.h.b16 %v231
    %v256 = vpack.c.b16 %v240, %v240
    %v257 = vpack.c.b16 %v241, %v241
    %v258 = vpack.c.b16 %v242, %v242
    %v259 = vpack.c.b16 %v243, %v243
    %v260 = vpack.c.b16 %v244, %v244
    %v261 = vpack.c.b16 %v245, %v245
    %v262 = vpack.c.b16 %v246, %v246
    %v263 = vpack.c.b16 %v247, %v247
    %v264 = vpack.c.b16 %v248, %v248
    %v265 = vpack.c.b16 %v249, %v249
    %v266 = vpack.c.b16 %v250, %v250
    %v267 = vpack.c.b16 %v251, %v251
    %v268 = vpack.c.b16 %v252, %v252
    %v269 = vpack.c.b16 %v253, %v253
    %v270 = vpack.c.b16 %v254, %v254
    %v271 = vpack.c.b16 %v255, %v255
    %vm288 = vcmask 257024
    %289 = vst.msk [vmem:[#allocation8] sm:$0xf] %vm288, %v256
    %290 = vst.msk [vmem:[#allocation8 + $0x4] sm:$0xf] %vm288, %v257
    %291 = vst.msk [vmem:[#allocation8 + $0x8] sm:$0xf] %vm288, %v258
    %292 = vst.msk [vmem:[#allocation8 + $0xc] sm:$0xf] %vm288, %v259
    %293 = vst.msk [vmem:[#allocation8 + $0x10] sm:$0xf] %vm288, %v260
    %294 = vst.msk [vmem:[#allocation8 + $0x14] sm:$0xf] %vm288, %v261
    %295 = vst.msk [vmem:[#allocation8 + $0x18] sm:$0xf] %vm288, %v262
    %296 = vst.msk [vmem:[#allocation8 + $0x1c] sm:$0xf] %vm288, %v263
    %297 = vst.msk [vmem:[#allocation8 + $0x20] sm:$0xf] %vm288, %v264
    %298 = vst.msk [vmem:[#allocation8 + $0x24] sm:$0xf] %vm288, %v265
    %299 = vst.msk [vmem:[#allocation8 + $0x28] sm:$0xf] %vm288, %v266
    %300 = vst.msk [vmem:[#allocation8 + $0x2c] sm:$0xf] %vm288, %v267
    %301 = vst.msk [vmem:[#allocation8 + $0x30] sm:$0xf] %vm288, %v268
    %302 = vst.msk [vmem:[#allocation8 + $0x34] sm:$0xf] %vm288, %v269
    %303 = vst.msk [vmem:[#allocation8 + $0x38] sm:$0xf] %vm288, %v270
    %304 = vst.msk [vmem:[#allocation8 + $0x3c] sm:$0xf] %vm288, %v271
    // Predicated region
    $region26: #{tpu_custom_call.1} parent=1 // pred_check
      _
    $region27: #{tpu_custom_call.1} parent=1 // pred_check_branch
      %306 = sbr.rel (0) target = $region29
    $region28: #{tpu_custom_call.1} parent=1 // pred_region
      %s308 = ssub.s32 1024, 1024
      %309 = vsyncadd [#allocation4], %s308
      %s310 = sshll.u32 [#allocation8], 4
      %s311 = int_to_ptr.vmem [resolvable:$true] %s310
      %316 = dma.vmem_to_hbm [thread:$0]  %s311, 1024, %s3, [#allocation4], 64, 64, 4
    $region29: #{tpu_custom_call.1} parent=1 // pred_fallthru
      _
    // Predicated region
    $region30: #{tpu_custom_call.1} parent=1 // pred_check
      _
    $region31: #{tpu_custom_call.1} parent=1 // pred_check_branch
      %318 = sbr.rel (0) target = $region33
    $region32: #{tpu_custom_call.1} parent=1 // pred_region
      %319 = dma.done [#allocation4], 1024
    $region33: #{tpu_custom_call.1} parent=1 // pred_fallthru
      _
    %320 = vsyncpa [#allocation3], 1
    %321 = vsyncpa [#allocation6], 1
    %322 = vsyncpa [#allocation4], 1

</llo_original>
